<compile_context>
chip_gen: v5e
topology: v5e:2x2
jax: 0.10.0
libtpu: 0.0.40
codegen_flags: <defaults>
</compile_context>

<pallas_src>
import jax
import jax.numpy as jnp
from jax.experimental import pallas as pl
from jax.experimental.pallas import tpu as pltpu

K_IN = 784
NUM_CLASSES = 10
OUT_PAD = 128       # lane-dense output slab; real classes are columns [:10]
NEG_BIG = -1e30     # bias for padded logit columns -> exp underflows to 0


def mlp_kernel(x_ref,
               w1_ref, b1_ref, w2_ref, b2_ref, w3_ref, b3_ref,
               w4_ref, b4_ref, w5_ref, b5_ref, w6_ref, b6_ref,
               out_ref):
    """One batch tile: 5x(Linear+ReLU), Linear, log_softmax."""

    def linear(h, w_ref, b_ref):
        y = jnp.dot(h, w_ref[...], preferred_element_type=jnp.float32)
        return y + b_ref[...]        # bias (1, out) broadcasts over batch

    # x tile arrives as f32 straight from HBM; cast to bf16 for the MXU here.
    h = x_ref[...].astype(jnp.bfloat16)                   # (TB, 784) bf16
    for w_ref, b_ref in ((w1_ref, b1_ref), (w2_ref, b2_ref),
                         (w3_ref, b3_ref), (w4_ref, b4_ref),
                         (w5_ref, b5_ref)):
        h = jnp.maximum(linear(h, w_ref, b_ref), 0.0).astype(jnp.bfloat16)

    logits = linear(h, w6_ref, b6_ref)                    # (TB, 128) f32

    # log_softmax along the lane axis; padded columns sit at ~-1e30 and
    # contribute exp(..)=0, so the result over the first 10 columns is exact.
    m = jnp.max(logits, axis=1, keepdims=True)
    shifted = logits - m
    lse = jnp.log(jnp.sum(jnp.exp(shifted), axis=1, keepdims=True))
    out_ref[...] = (shifted - lse).astype(out_ref.dtype)  # bf16 writeback


def prepare_params(params):
    """Pad the classifier's N dim to 128 (padded bias columns -> -1e30) and
    cast weights to bf16 (biases stay f32).  W1 is left at K=784."""
    (w1, b1), (w2, b2), (w3, b3), (w4, b4), (w5, b5), (w6, b6) = params
    w6p = jnp.zeros((w6.shape[0], OUT_PAD), jnp.float32).at[:, :w6.shape[1]].set(w6)
    b6p = jnp.full((1, OUT_PAD), NEG_BIG, jnp.float32).at[:, :b6.shape[1]].set(b6)
    layers = [(w1, b1), (w2, b2), (w3, b3), (w4, b4), (w5, b5), (w6p, b6p)]
    flat = []
    for w, b in layers:
        flat.append(w.astype(jnp.bfloat16))
        flat.append(b.astype(jnp.float32))
    return flat


def _choose_tb(batch):
    """Batch tile: up to 1024 rows (amortizes per-grid-step overhead), with at
    least 2 grid steps once the batch allows it (v7x has 2 TensorCores)."""
    if batch >= 2048:
        return 1024
    if batch >= 256:
        half = (batch + 1) // 2
        return max(128, ((half + 127) // 128) * 128)   # multiple of 128
    # tiny batches: single tile, rows rounded to the 8-sublane granule
    return max(8, ((batch + 7) // 8) * 8)


def mlp_forward(x, params):
    """x: (..., 784)-viewable f32 array; params: list of (W (in,out), b (1,out))
    f32 pairs.  Returns (B, 10) f32 log-probabilities."""
    x = jnp.reshape(x, (-1, K_IN))          # x.view(-1, 784)
    B = x.shape[0]
    flat = prepare_params(params)

    TB = _choose_tb(B)
    b_pad = pl.cdiv(B, TB) * TB
    if b_pad != B:
        # Only the batch axis is padded (zeros); no K padding / dtype copy.
        x_in = jnp.zeros((b_pad, K_IN), x.dtype).at[:B].set(x)
    else:
        x_in = x

    grid = (b_pad // TB,)

    def resident(arr):
        # full weight/bias stays resident in VMEM across all batch tiles
        return pl.BlockSpec(arr.shape, lambda i: (0, 0))

    in_specs = [pl.BlockSpec((TB, K_IN), lambda i: (i, 0))]
    in_specs += [resident(a) for a in flat]
    out_specs = pl.BlockSpec((TB, OUT_PAD), lambda i: (i, 0))

    layer_dims = [(K_IN, 256), (256, 128), (128, 64), (64, 32), (32, 16),
                  (16, OUT_PAD)]
    flops = 2 * b_pad * sum(i * o for i, o in layer_dims)
    bytes_accessed = (b_pad * K_IN * 4                                  # x f32
                      + sum(a.size * a.dtype.itemsize for a in flat)    # weights
                      + b_pad * OUT_PAD * 2)                            # bf16 out
    cost = pl.CostEstimate(flops=flops,
                           transcendentals=b_pad * (OUT_PAD + 1),
                           bytes_accessed=bytes_accessed)

    out_padded = pl.pallas_call(
        mlp_kernel,
        out_shape=jax.ShapeDtypeStruct((b_pad, OUT_PAD), jnp.bfloat16),
        grid=grid,
        in_specs=in_specs,
        out_specs=out_specs,
        compiler_params=pltpu.CompilerParams(
            dimension_semantics=("parallel",),
            vmem_limit_bytes=32 * 1024 * 1024),
        cost_estimate=cost,
    )(x_in, *flat)

    return out_padded[:B, :NUM_CLASSES].astype(jnp.float32)


def init_params(key):
    """Deterministic init mimicking nn.Linear (uniform +/- 1/sqrt(fan_in))."""
    dims = [(784, 256), (256, 128), (128, 64), (64, 32), (32, 16), (16, 10)]
    params = []
    for (fan_in, fan_out) in dims:
        key, kw, kb = jax.random.split(key, 3)
        bound = 1.0 / jnp.sqrt(fan_in)
        w = jax.random.uniform(kw, (fan_in, fan_out), jnp.float32,
                               minval=-bound, maxval=bound)
        b = jax.random.uniform(kb, (1, fan_out), jnp.float32,
                               minval=-bound, maxval=bound)
        params.append((w, b))
    return params


def reference_forward(x, params):
    """Pure-JAX f32 reference (matches the PyTorch module)."""
    h = x
    for (w, b) in params[:-1]:
        h = jnp.maximum(h @ w + b, 0.0)
    w, b = params[-1]
    logits = h @ w + b
    return jax.nn.log_softmax(logits, axis=1)


if __name__ == "__main__":
    key = jax.random.PRNGKey(0)
    key, kx = jax.random.split(key)

    B = 8
    # forward does x.view(-1, 784); feed image-like (B, 1, 28, 28)
    x_img = jax.random.normal(kx, (B, 1, 28, 28), jnp.float32)
    x = x_img.reshape(-1, 784)

    params = init_params(key)

    out = mlp_forward(x_img, params)
    out = jax.block_until_ready(out)

    ref = reference_forward(x, params)
    assert out.shape == (B, 10)
    # bf16 MXU operands / bf16 writeback (f32 accumulation) -> loose tolerance
    assert jnp.allclose(out, ref, atol=3e-2, rtol=3e-2), "mismatch vs reference"

    print("KERNEL_OK")
</pallas_src>

<mosaic_0001>
module attributes {stable_mosaic.version = 11 : i64} {
  func.func @mlp_kernel(%arg0: i32, %arg1: memref<8x784xf32, #tpu.memory_space<vmem>>, %arg2: memref<784x256xbf16, #tpu.memory_space<vmem>>, %arg3: memref<1x256xf32, #tpu.memory_space<vmem>>, %arg4: memref<256x128xbf16, #tpu.memory_space<vmem>>, %arg5: memref<1x128xf32, #tpu.memory_space<vmem>>, %arg6: memref<128x64xbf16, #tpu.memory_space<vmem>>, %arg7: memref<1x64xf32, #tpu.memory_space<vmem>>, %arg8: memref<64x32xbf16, #tpu.memory_space<vmem>>, %arg9: memref<1x32xf32, #tpu.memory_space<vmem>>, %arg10: memref<32x16xbf16, #tpu.memory_space<vmem>>, %arg11: memref<1x16xf32, #tpu.memory_space<vmem>>, %arg12: memref<16x128xbf16, #tpu.memory_space<vmem>>, %arg13: memref<1x128xf32, #tpu.memory_space<vmem>>, %arg14: memref<8x128xbf16, #tpu.memory_space<vmem>>) attributes {dimension_semantics = [#tpu.dimension_semantics<parallel>], iteration_bounds = array<i64: 1>, scalar_prefetch = 0 : i64, scratch_operands = 0 : i64, tpu.core_type = #tpu.core_type<tc>, window_params = [{transform_indices = @transform_0, window_bounds = array<i64: 8, 784>}, {pipeline_mode = #tpu.pipeline_mode<synchronous>, transform_indices = @transform_1, window_bounds = array<i64: 784, 256>}, {pipeline_mode = #tpu.pipeline_mode<synchronous>, transform_indices = @transform_2, window_bounds = array<i64: 1, 256>}, {pipeline_mode = #tpu.pipeline_mode<synchronous>, transform_indices = @transform_3, window_bounds = array<i64: 256, 128>}, {pipeline_mode = #tpu.pipeline_mode<synchronous>, transform_indices = @transform_4, window_bounds = array<i64: 1, 128>}, {pipeline_mode = #tpu.pipeline_mode<synchronous>, transform_indices = @transform_5, window_bounds = array<i64: 128, 64>}, {pipeline_mode = #tpu.pipeline_mode<synchronous>, transform_indices = @transform_6, window_bounds = array<i64: 1, 64>}, {pipeline_mode = #tpu.pipeline_mode<synchronous>, transform_indices = @transform_7, window_bounds = array<i64: 64, 32>}, {pipeline_mode = #tpu.pipeline_mode<synchronous>, transform_indices = @transform_8, window_bounds = array<i64: 1, 32>}, {pipeline_mode = #tpu.pipeline_mode<synchronous>, transform_indices = @transform_9, window_bounds = array<i64: 32, 16>}, {pipeline_mode = #tpu.pipeline_mode<synchronous>, transform_indices = @transform_10, window_bounds = array<i64: 1, 16>}, {pipeline_mode = #tpu.pipeline_mode<synchronous>, transform_indices = @transform_11, window_bounds = array<i64: 16, 128>}, {pipeline_mode = #tpu.pipeline_mode<synchronous>, transform_indices = @transform_12, window_bounds = array<i64: 1, 128>}, {transform_indices = @transform_13, window_bounds = array<i64: 8, 128>}]} {
    %c0 = arith.constant 0 : index
    %c0_0 = arith.constant 0 : index
    %0 = vector.load %arg1[%c0, %c0_0] : memref<8x784xf32, #tpu.memory_space<vmem>>, vector<8x784xf32>
    %1 = arith.truncf %0 : vector<8x784xf32> to vector<8x784xbf16>
    %c0_1 = arith.constant 0 : index
    %c0_2 = arith.constant 0 : index
    %2 = vector.load %arg2[%c0_1, %c0_2] : memref<784x256xbf16, #tpu.memory_space<vmem>>, vector<784x256xbf16>
    %cst = arith.constant dense<0.000000e+00> : vector<8x256xf32>
    %3 = tpu.matmul %1, %2, %cst {dimension_numbers = #tpu.dot_dimension_numbers<[1], [0], [0], [1], [0, 0, 1, 1], [], []>} : vector<8x784xbf16>, vector<784x256xbf16>, vector<8x256xf32> -> vector<8x256xf32>
    %c0_3 = arith.constant 0 : index
    %c0_4 = arith.constant 0 : index
    %4 = vector.load %arg3[%c0_3, %c0_4] : memref<1x256xf32, #tpu.memory_space<vmem>>, vector<1x256xf32>
    %5 = vector.broadcast %4 : vector<1x256xf32> to vector<8x256xf32>
    %6 = arith.addf %3, %5 : vector<8x256xf32>
    %cst_5 = arith.constant 0.000000e+00 : f32
    %7 = vector.broadcast %cst_5 : f32 to vector<8x256xf32>
    %8 = arith.maximumf %6, %7 : vector<8x256xf32>
    %9 = arith.truncf %8 : vector<8x256xf32> to vector<8x256xbf16>
    %c0_6 = arith.constant 0 : index
    %c0_7 = arith.constant 0 : index
    %10 = vector.load %arg4[%c0_6, %c0_7] : memref<256x128xbf16, #tpu.memory_space<vmem>>, vector<256x128xbf16>
    %cst_8 = arith.constant dense<0.000000e+00> : vector<8x128xf32>
    %11 = tpu.matmul %9, %10, %cst_8 {dimension_numbers = #tpu.dot_dimension_numbers<[1], [0], [0], [1], [0, 0, 1, 1], [], []>} : vector<8x256xbf16>, vector<256x128xbf16>, vector<8x128xf32> -> vector<8x128xf32>
    %c0_9 = arith.constant 0 : index
    %c0_10 = arith.constant 0 : index
    %12 = vector.load %arg5[%c0_9, %c0_10] : memref<1x128xf32, #tpu.memory_space<vmem>>, vector<1x128xf32>
    %13 = vector.broadcast %12 : vector<1x128xf32> to vector<8x128xf32>
    %14 = arith.addf %11, %13 : vector<8x128xf32>
    %cst_11 = arith.constant 0.000000e+00 : f32
    %15 = vector.broadcast %cst_11 : f32 to vector<8x128xf32>
    %16 = arith.maximumf %14, %15 : vector<8x128xf32>
    %17 = arith.truncf %16 : vector<8x128xf32> to vector<8x128xbf16>
    %c0_12 = arith.constant 0 : index
    %c0_13 = arith.constant 0 : index
    %18 = vector.load %arg6[%c0_12, %c0_13] : memref<128x64xbf16, #tpu.memory_space<vmem>>, vector<128x64xbf16>
    %cst_14 = arith.constant dense<0.000000e+00> : vector<8x64xf32>
    %19 = tpu.matmul %17, %18, %cst_14 {dimension_numbers = #tpu.dot_dimension_numbers<[1], [0], [0], [1], [0, 0, 1, 1], [], []>} : vector<8x128xbf16>, vector<128x64xbf16>, vector<8x64xf32> -> vector<8x64xf32>
    %c0_15 = arith.constant 0 : index
    %c0_16 = arith.constant 0 : index
    %20 = vector.load %arg7[%c0_15, %c0_16] : memref<1x64xf32, #tpu.memory_space<vmem>>, vector<1x64xf32>
    %21 = vector.broadcast %20 : vector<1x64xf32> to vector<8x64xf32>
    %22 = arith.addf %19, %21 : vector<8x64xf32>
    %cst_17 = arith.constant 0.000000e+00 : f32
    %23 = vector.broadcast %cst_17 : f32 to vector<8x64xf32>
    %24 = arith.maximumf %22, %23 : vector<8x64xf32>
    %25 = arith.truncf %24 : vector<8x64xf32> to vector<8x64xbf16>
    %c0_18 = arith.constant 0 : index
    %c0_19 = arith.constant 0 : index
    %26 = vector.load %arg8[%c0_18, %c0_19] : memref<64x32xbf16, #tpu.memory_space<vmem>>, vector<64x32xbf16>
    %cst_20 = arith.constant dense<0.000000e+00> : vector<8x32xf32>
    %27 = tpu.matmul %25, %26, %cst_20 {dimension_numbers = #tpu.dot_dimension_numbers<[1], [0], [0], [1], [0, 0, 1, 1], [], []>} : vector<8x64xbf16>, vector<64x32xbf16>, vector<8x32xf32> -> vector<8x32xf32>
    %c0_21 = arith.constant 0 : index
    %c0_22 = arith.constant 0 : index
    %28 = vector.load %arg9[%c0_21, %c0_22] : memref<1x32xf32, #tpu.memory_space<vmem>>, vector<1x32xf32>
    %29 = vector.broadcast %28 : vector<1x32xf32> to vector<8x32xf32>
    %30 = arith.addf %27, %29 : vector<8x32xf32>
    %cst_23 = arith.constant 0.000000e+00 : f32
    %31 = vector.broadcast %cst_23 : f32 to vector<8x32xf32>
    %32 = arith.maximumf %30, %31 : vector<8x32xf32>
    %33 = arith.truncf %32 : vector<8x32xf32> to vector<8x32xbf16>
    %c0_24 = arith.constant 0 : index
    %c0_25 = arith.constant 0 : index
    %34 = vector.load %arg10[%c0_24, %c0_25] : memref<32x16xbf16, #tpu.memory_space<vmem>>, vector<32x16xbf16>
    %cst_26 = arith.constant dense<0.000000e+00> : vector<8x16xf32>
    %35 = tpu.matmul %33, %34, %cst_26 {dimension_numbers = #tpu.dot_dimension_numbers<[1], [0], [0], [1], [0, 0, 1, 1], [], []>} : vector<8x32xbf16>, vector<32x16xbf16>, vector<8x16xf32> -> vector<8x16xf32>
    %c0_27 = arith.constant 0 : index
    %c0_28 = arith.constant 0 : index
    %36 = vector.load %arg11[%c0_27, %c0_28] : memref<1x16xf32, #tpu.memory_space<vmem>>, vector<1x16xf32>
    %37 = vector.broadcast %36 : vector<1x16xf32> to vector<8x16xf32>
    %38 = arith.addf %35, %37 : vector<8x16xf32>
    %cst_29 = arith.constant 0.000000e+00 : f32
    %39 = vector.broadcast %cst_29 : f32 to vector<8x16xf32>
    %40 = arith.maximumf %38, %39 : vector<8x16xf32>
    %41 = arith.truncf %40 : vector<8x16xf32> to vector<8x16xbf16>
    %c0_30 = arith.constant 0 : index
    %c0_31 = arith.constant 0 : index
    %42 = vector.load %arg12[%c0_30, %c0_31] : memref<16x128xbf16, #tpu.memory_space<vmem>>, vector<16x128xbf16>
    %cst_32 = arith.constant dense<0.000000e+00> : vector<8x128xf32>
    %43 = tpu.matmul %41, %42, %cst_32 {dimension_numbers = #tpu.dot_dimension_numbers<[1], [0], [0], [1], [0, 0, 1, 1], [], []>} : vector<8x16xbf16>, vector<16x128xbf16>, vector<8x128xf32> -> vector<8x128xf32>
    %c0_33 = arith.constant 0 : index
    %c0_34 = arith.constant 0 : index
    %44 = vector.load %arg13[%c0_33, %c0_34] : memref<1x128xf32, #tpu.memory_space<vmem>>, vector<1x128xf32>
    %45 = vector.broadcast %44 : vector<1x128xf32> to vector<8x128xf32>
    %46 = arith.addf %43, %45 : vector<8x128xf32>
    %cst_35 = arith.constant dense<0xFF800000> : vector<8xf32>
    %47 = vector.multi_reduction <maximumf>, %46, %cst_35 [1] : vector<8x128xf32> to vector<8xf32>
    %48 = vector.shape_cast %47 : vector<8xf32> to vector<8x1xf32>
    %49 = vector.broadcast %48 : vector<8x1xf32> to vector<8x128xf32>
    %50 = arith.subf %46, %49 : vector<8x128xf32>
    %51 = math.exp %50 : vector<8x128xf32>
    %cst_36 = arith.constant dense<0.000000e+00> : vector<8xf32>
    %52 = vector.multi_reduction <add>, %51, %cst_36 [1] : vector<8x128xf32> to vector<8xf32>
    %53 = vector.shape_cast %52 : vector<8xf32> to vector<8x1xf32>
    %54 = math.log %53 : vector<8x1xf32>
    %55 = vector.broadcast %54 : vector<8x1xf32> to vector<8x128xf32>
    %56 = arith.subf %50, %55 : vector<8x128xf32>
    %57 = arith.truncf %56 : vector<8x128xf32> to vector<8x128xbf16>
    %c0_37 = arith.constant 0 : index
    %c0_38 = arith.constant 0 : index
    %58 = vector.load %arg14[%c0_37, %c0_38] : memref<8x128xbf16, #tpu.memory_space<vmem>>, vector<8x128xbf16>
    tpu.vector_store %arg14[%c0_37, %c0_38], %57 {strides = array<i32>} : memref<8x128xbf16, #tpu.memory_space<vmem>>, vector<8x128xbf16>,
    return
  }
  func.func @transform_0(%arg0: i32) -> (i32, i32) {
    %c0_i32 = arith.constant 0 : i32
    %c0_i32_0 = arith.constant 0 : i32
    return %arg0, %c0_i32 : i32, i32
  }
  func.func @transform_1(%arg0: i32) -> (i32, i32) {
    %c0_i32 = arith.constant 0 : i32
    %c0_i32_0 = arith.constant 0 : i32
    %c0_i32_1 = arith.constant 0 : i32
    return %c0_i32, %c0_i32_0 : i32, i32
  }
  func.func @transform_2(%arg0: i32) -> (i32, i32) {
    %c0_i32 = arith.constant 0 : i32
    %c0_i32_0 = arith.constant 0 : i32
    %c0_i32_1 = arith.constant 0 : i32
    return %c0_i32, %c0_i32_0 : i32, i32
  }
  func.func @transform_3(%arg0: i32) -> (i32, i32) {
    %c0_i32 = arith.constant 0 : i32
    %c0_i32_0 = arith.constant 0 : i32
    %c0_i32_1 = arith.constant 0 : i32
    return %c0_i32, %c0_i32_0 : i32, i32
  }
  func.func @transform_4(%arg0: i32) -> (i32, i32) {
    %c0_i32 = arith.constant 0 : i32
    %c0_i32_0 = arith.constant 0 : i32
    %c0_i32_1 = arith.constant 0 : i32
    return %c0_i32, %c0_i32_0 : i32, i32
  }
  func.func @transform_5(%arg0: i32) -> (i32, i32) {
    %c0_i32 = arith.constant 0 : i32
    %c0_i32_0 = arith.constant 0 : i32
    %c0_i32_1 = arith.constant 0 : i32
    return %c0_i32, %c0_i32_0 : i32, i32
  }
  func.func @transform_6(%arg0: i32) -> (i32, i32) {
    %c0_i32 = arith.constant 0 : i32
    %c0_i32_0 = arith.constant 0 : i32
    %c0_i32_1 = arith.constant 0 : i32
    return %c0_i32, %c0_i32_0 : i32, i32
  }
  func.func @transform_7(%arg0: i32) -> (i32, i32) {
    %c0_i32 = arith.constant 0 : i32
    %c0_i32_0 = arith.constant 0 : i32
    %c0_i32_1 = arith.constant 0 : i32
    return %c0_i32, %c0_i32_0 : i32, i32
  }
  func.func @transform_8(%arg0: i32) -> (i32, i32) {
    %c0_i32 = arith.constant 0 : i32
    %c0_i32_0 = arith.constant 0 : i32
    %c0_i32_1 = arith.constant 0 : i32
    return %c0_i32, %c0_i32_0 : i32, i32
  }
  func.func @transform_9(%arg0: i32) -> (i32, i32) {
    %c0_i32 = arith.constant 0 : i32
    %c0_i32_0 = arith.constant 0 : i32
    %c0_i32_1 = arith.constant 0 : i32
    return %c0_i32, %c0_i32_0 : i32, i32
  }
  func.func @transform_10(%arg0: i32) -> (i32, i32) {
    %c0_i32 = arith.constant 0 : i32
    %c0_i32_0 = arith.constant 0 : i32
    %c0_i32_1 = arith.constant 0 : i32
    return %c0_i32, %c0_i32_0 : i32, i32
  }
  func.func @transform_11(%arg0: i32) -> (i32, i32) {
    %c0_i32 = arith.constant 0 : i32
    %c0_i32_0 = arith.constant 0 : i32
    %c0_i32_1 = arith.constant 0 : i32
    return %c0_i32, %c0_i32_0 : i32, i32
  }
  func.func @transform_12(%arg0: i32) -> (i32, i32) {
    %c0_i32 = arith.constant 0 : i32
    %c0_i32_0 = arith.constant 0 : i32
    %c0_i32_1 = arith.constant 0 : i32
    return %c0_i32, %c0_i32_0 : i32, i32
  }
  func.func @transform_13(%arg0: i32) -> (i32, i32) {
    %c0_i32 = arith.constant 0 : i32
    %c0_i32_0 = arith.constant 0 : i32
    return %arg0, %c0_i32 : i32, i32
  }
}

</mosaic_0001>

<llo_original>
// kernel: tpu_custom_call.1
$region0: #{tpu_custom_call.1}
  #allocation0 [shape = 'u32[]', space=smem, size = 0x4, offset = 0x4, fixed_abs, tag = 'smem constant byte address 0x4 - core index']
  #allocation1 [shape = 'u32[72,128]{1,0:T(1,128)}', space=vmem, size = 0x9000, scoped, tag = 'internal scratch']
  %s0 = inlined_call_operand.hbm [shape: f32[8,784], index: 0, kind: input, shape index: {}]
  %s1 = inlined_call_operand.hbm [shape: bf16[784,256], index: 1, kind: input, shape index: {}]
  %s2 = inlined_call_operand.hbm [shape: f32[1,256], index: 2, kind: input, shape index: {}]
  %s3 = inlined_call_operand.vmem [shape: bf16[256,128], index: 3, kind: input, shape index: {}]
  %s4 = inlined_call_operand.hbm [shape: f32[1,128], index: 4, kind: input, shape index: {}]
  %s5 = inlined_call_operand.vmem [shape: bf16[128,64], index: 5, kind: input, shape index: {}]
  %s6 = inlined_call_operand.hbm [shape: f32[1,64], index: 6, kind: input, shape index: {}]
  %s7 = inlined_call_operand.vmem [shape: bf16[64,32], index: 7, kind: input, shape index: {}]
  %s8 = inlined_call_operand.hbm [shape: f32[1,32], index: 8, kind: input, shape index: {}]
  %s9 = inlined_call_operand.vmem [shape: bf16[32,16], index: 9, kind: input, shape index: {}]
  %s10 = inlined_call_operand.vmem [shape: f32[1,16], index: 10, kind: input, shape index: {}]
  %s11 = inlined_call_operand.vmem [shape: bf16[16,128], index: 11, kind: input, shape index: {}]
  %s12 = inlined_call_operand.vmem [shape: f32[1,128], index: 12, kind: input, shape index: {}]
  %s13 = inlined_call_operand.hbm [shape: bf16[8,128], index: 13, kind: output, shape index: {}]
  %s14 = sld [smem:[#allocation0]]
  $region86: #{tpu_custom_call.1} parent=0
    _
  %s16 = ssub.s32 1, %s14
  %s17 = scalar_select 0, %s16, %s14
  $region1: #{tpu_custom_call.1} parent=0
    #allocation2 [shape = 'u8[28672]{0}', space=vmem, size = 0x7000, scoped, tag = 'input window, operand 0, single buffered']
    #allocation3 [shape = 's32[1]{0}', space=sflag, size = 0x4, scoped, tag = 'scoped memory for tpu_custom_call.1']
    #allocation4 [shape = 's32[1]{0}', space=sflag, size = 0x4, scoped, tag = 'scoped memory for tpu_custom_call.1']
    #allocation5 [shape = 'u8[401408]{0}', space=vmem, size = 0x62000, scoped, tag = 'input window, operand 1, single buffered']
    #allocation6 [shape = 's32[1]{0}', space=sflag, size = 0x4, scoped, tag = 'scoped memory for tpu_custom_call.1']
    #allocation7 [shape = 'u8[1024]{0}', space=vmem, size = 0x400, scoped, tag = 'input window, operand 2, single buffered']
    #allocation8 [shape = 'u8[512]{0}', space=vmem, size = 0x400, scoped, tag = 'input window, operand 4, single buffered']
    #allocation9 [shape = 's32[1]{0}', space=sflag, size = 0x4, scoped, tag = 'scoped memory for tpu_custom_call.1']
    #allocation10 [shape = 'u8[512]{0}', space=vmem, size = 0x400, scoped, tag = 'input window, operand 6, single buffered']
    #allocation11 [shape = 'u8[512]{0}', space=vmem, size = 0x400, scoped, tag = 'input window, operand 8, single buffered']
    #allocation12 [shape = 's32[1]{0}', space=sflag, size = 0x4, scoped, tag = 'scoped memory for tpu_custom_call.1']
    #allocation13 [shape = 'u8[2048]{0}', space=vmem, size = 0x800, scoped, tag = 'output window, operand 0, single buffered']
    %18 = vsyncpa [#allocation3], 0
    %19 = vsyncpa [#allocation6], 0
    %20 = vsyncpa [#allocation9], 0
    %21 = vsyncpa [#allocation12], 0
    %22 = vsyncpa [#allocation4], 0
    // Predicated region
    $region2: #{tpu_custom_call.1} parent=1 // pred_check
      _
    $region3: #{tpu_custom_call.1} parent=1 // pred_check_branch
      %24 = sbr.rel (0) target = $region5
    $region4: #{tpu_custom_call.1} parent=1 // pred_region
      %26 = vsyncadd [#allocation3], 0
      %s28 = sshll.u32 %s0, 4
      %s29 = int_to_ptr.hbm [resolvable:$true] %s28
      %s30 = sshll.u32 [#allocation2], 4
      %s31 = int_to_ptr.vmem [resolvable:$true] %s30
      %33 = dma.hbm_to_vmem [thread:$0]  %s29, 896, %s31, [#allocation3]
    $region5: #{tpu_custom_call.1} parent=1 // pred_fallthru
      _
    // Predicated region
    $region6: #{tpu_custom_call.1} parent=1 // pred_check
      _
    $region7: #{tpu_custom_call.1} parent=1 // pred_check_branch
      %35 = sbr.rel (0) target = $region9
    $region8: #{tpu_custom_call.1} parent=1 // pred_region
      %37 = vsyncadd [#allocation6], 0
      %s38 = sshll.u32 %s1, 4
      %s39 = int_to_ptr.hbm [resolvable:$true] %s38
      %s40 = sshll.u32 [#allocation5], 4
      %s41 = int_to_ptr.vmem [resolvable:$true] %s40
      %46 = dma.hbm_to_vmem [thread:$0]  %s39, 12544, %s41, [#allocation6], 128, 128, 8
    $region9: #{tpu_custom_call.1} parent=1 // pred_fallthru
      _
    // Predicated region
    $region10: #{tpu_custom_call.1} parent=1 // pred_check
      _
    $region11: #{tpu_custom_call.1} parent=1 // pred_check_branch
      %48 = sbr.rel (0) target = $region13
    $region12: #{tpu_custom_call.1} parent=1 // pred_region
      %50 = vsyncadd [#allocation6], 0
      %s52 = sshll.u32 %s2, 4
      %s53 = int_to_ptr.hbm [resolvable:$true] %s52
      %s54 = sshll.u32 [#allocation7], 4
      %s55 = int_to_ptr.vmem [resolvable:$true] %s54
      %57 = dma.hbm_to_vmem [thread:$0]  %s53, 32, %s55, [#allocation6]
    $region13: #{tpu_custom_call.1} parent=1 // pred_fallthru
      _
    // Predicated region
    $region14: #{tpu_custom_call.1} parent=1 // pred_check
      _
    $region15: #{tpu_custom_call.1} parent=1 // pred_check_branch
      %59 = sbr.rel (0) target = $region17
    $region16: #{tpu_custom_call.1} parent=1 // pred_region
      _
    $region17: #{tpu_custom_call.1} parent=1 // pred_fallthru
      _
    // Predicated region
    $region18: #{tpu_custom_call.1} parent=1 // pred_check
      _
    $region19: #{tpu_custom_call.1} parent=1 // pred_check_branch
      %61 = sbr.rel (0) target = $region21
    $region20: #{tpu_custom_call.1} parent=1 // pred_region
      %63 = vsyncadd [#allocation9], 0
      %s65 = sshll.u32 %s4, 4
      %s66 = int_to_ptr.hbm [resolvable:$true] %s65
      %s67 = sshll.u32 [#allocation8], 4
      %s68 = int_to_ptr.vmem [resolvable:$true] %s67
      %70 = dma.hbm_to_vmem [thread:$0]  %s66, 16, %s68, [#allocation9]
    $region21: #{tpu_custom_call.1} parent=1 // pred_fallthru
      _
    // Predicated region
    $region22: #{tpu_custom_call.1} parent=1 // pred_check
      _
    $region23: #{tpu_custom_call.1} parent=1 // pred_check_branch
      %72 = sbr.rel (0) target = $region25
    $region24: #{tpu_custom_call.1} parent=1 // pred_region
      _
    $region25: #{tpu_custom_call.1} parent=1 // pred_fallthru
      _
    // Predicated region
    $region26: #{tpu_custom_call.1} parent=1 // pred_check
      _
    $region27: #{tpu_custom_call.1} parent=1 // pred_check_branch
      %74 = sbr.rel (0) target = $region29
    $region28: #{tpu_custom_call.1} parent=1 // pred_region
      %76 = vsyncadd [#allocation9], 0
      %s78 = sshll.u32 %s6, 4
      %s79 = int_to_ptr.hbm [resolvable:$true] %s78
      %s80 = sshll.u32 [#allocation10], 4
      %s81 = int_to_ptr.vmem [resolvable:$true] %s80
      %83 = dma.hbm_to_vmem [thread:$0]  %s79, 16, %s81, [#allocation9]
    $region29: #{tpu_custom_call.1} parent=1 // pred_fallthru
      _
    // Predicated region
    $region30: #{tpu_custom_call.1} parent=1 // pred_check
      _
    $region31: #{tpu_custom_call.1} parent=1 // pred_check_branch
      %85 = sbr.rel (0) target = $region33
    $region32: #{tpu_custom_call.1} parent=1 // pred_region
      _
    $region33: #{tpu_custom_call.1} parent=1 // pred_fallthru
      _
    // Predicated region
    $region34: #{tpu_custom_call.1} parent=1 // pred_check
      _
    $region35: #{tpu_custom_call.1} parent=1 // pred_check_branch
      %87 = sbr.rel (0) target = $region37
    $region36: #{tpu_custom_call.1} parent=1 // pred_region
      %89 = vsyncadd [#allocation12], 0
      %s91 = sshll.u32 %s8, 4
      %s92 = int_to_ptr.hbm [resolvable:$true] %s91
      %s93 = sshll.u32 [#allocation11], 4
      %s94 = int_to_ptr.vmem [resolvable:$true] %s93
      %96 = dma.hbm_to_vmem [thread:$0]  %s92, 16, %s94, [#allocation12]
    $region37: #{tpu_custom_call.1} parent=1 // pred_fallthru
      _
    // Predicated region
    $region38: #{tpu_custom_call.1} parent=1 // pred_check
      _
    $region39: #{tpu_custom_call.1} parent=1 // pred_check_branch
      %98 = sbr.rel (0) target = $region41
    $region40: #{tpu_custom_call.1} parent=1 // pred_region
      _
    $region41: #{tpu_custom_call.1} parent=1 // pred_fallthru
      _
    // Predicated region
    $region42: #{tpu_custom_call.1} parent=1 // pred_check
      _
    $region43: #{tpu_custom_call.1} parent=1 // pred_check_branch
      %100 = sbr.rel (0) target = $region45
    $region44: #{tpu_custom_call.1} parent=1 // pred_region
      _
    $region45: #{tpu_custom_call.1} parent=1 // pred_fallthru
      _
    // Predicated region
    $region46: #{tpu_custom_call.1} parent=1 // pred_check
      _
    $region47: #{tpu_custom_call.1} parent=1 // pred_check_branch
      %102 = sbr.rel (0) target = $region49
    $region48: #{tpu_custom_call.1} parent=1 // pred_region
      _
    $region49: #{tpu_custom_call.1} parent=1 // pred_fallthru
      _
    // Predicated region
    $region50: #{tpu_custom_call.1} parent=1 // pred_check
      _
    $region51: #{tpu_custom_call.1} parent=1 // pred_check_branch
      %104 = sbr.rel (0) target = $region53
    $region52: #{tpu_custom_call.1} parent=1 // pred_region
      _
    $region53: #{tpu_custom_call.1} parent=1 // pred_fallthru
      _
    // Predicated region
    $region54: #{tpu_custom_call.1} parent=1 // pred_check
      _
    $region55: #{tpu_custom_call.1} parent=1 // pred_check_branch
      %106 = sbr.rel (0) target = $region57
    $region56: #{tpu_custom_call.1} parent=1 // pred_region
      %108 = dma.done [#allocation3], 896
    $region57: #{tpu_custom_call.1} parent=1 // pred_fallthru
      _
    // Predicated region
    $region58: #{tpu_custom_call.1} parent=1 // pred_check
      _
    $region59: #{tpu_custom_call.1} parent=1 // pred_check_branch
      %110 = sbr.rel (0) target = $region61
    $region60: #{tpu_custom_call.1} parent=1 // pred_region
      %112 = dma.done [#allocation6], 12544
    $region61: #{tpu_custom_call.1} parent=1 // pred_fallthru
      _
    // Predicated region
    $region62: #{tpu_custom_call.1} parent=1 // pred_check
      _
    $region63: #{tpu_custom_call.1} parent=1 // pred_check_branch
      %114 = sbr.rel (0) target = $region65
    $region64: #{tpu_custom_call.1} parent=1 // pred_region
      %116 = dma.done [#allocation6], 32
    $region65: #{tpu_custom_call.1} parent=1 // pred_fallthru
      _
    // Predicated region
    $region66: #{tpu_custom_call.1} parent=1 // pred_check
      _
    $region67: #{tpu_custom_call.1} parent=1 // pred_check_branch
      %118 = sbr.rel (0) target = $region69
    $region68: #{tpu_custom_call.1} parent=1 // pred_region
      %120 = dma.done [#allocation9], 16
    $region69: #{tpu_custom_call.1} parent=1 // pred_fallthru
      _
    // Predicated region
    $region70: #{tpu_custom_call.1} parent=1 // pred_check
      _
    $region71: #{tpu_custom_call.1} parent=1 // pred_check_branch
      %122 = sbr.rel (0) target = $region73
    $region72: #{tpu_custom_call.1} parent=1 // pred_region
      %124 = dma.done [#allocation9], 16
    $region73: #{tpu_custom_call.1} parent=1 // pred_fallthru
      _
    // Predicated region
    $region74: #{tpu_custom_call.1} parent=1 // pred_check
      _
    $region75: #{tpu_custom_call.1} parent=1 // pred_check_branch
      %126 = sbr.rel (0) target = $region77
    $region76: #{tpu_custom_call.1} parent=1 // pred_region
      %128 = dma.done [#allocation12], 16
    $region77: #{tpu_custom_call.1} parent=1 // pred_fallthru
      _
    %v130 = vld [vmem:[#allocation2] sm:$0xff]
    %v131 = vld [vmem:[#allocation2 + $0x8] sm:$0xff]
    %v132 = vld [vmem:[#allocation2 + $0x10] sm:$0xff]
    %v133 = vld [vmem:[#allocation2 + $0x18] sm:$0xff]
    %v134 = vld [vmem:[#allocation2 + $0x20] sm:$0xff]
    %v135 = vld [vmem:[#allocation2 + $0x28] sm:$0xff]
    %v136 = vld [vmem:[#allocation2 + $0x30] sm:$0xff]
    %v137 = vpack.c.bf16 %v130, %v130
    %v138 = vpack.c.bf16 %v131, %v131
    %v139 = vpack.c.bf16 %v132, %v132
    %v140 = vpack.c.bf16 %v133, %v133
    %v141 = vpack.c.bf16 %v134, %v134
    %v142 = vpack.c.bf16 %v135, %v135
    %v143 = vpack.c.bf16 %v136, %v136
    %v144 = vld [vmem:[#allocation5] sm:$0xff]
    %v145 = vld [vmem:[#allocation5 + $0x8] sm:$0xff]
    %v146 = vld [vmem:[#allocation5 + $0x10] sm:$0xff]
    %v147 = vld [vmem:[#allocation5 + $0x18] sm:$0xff]
    %v148 = vld [vmem:[#allocation5 + $0x20] sm:$0xff]
    %v149 = vld [vmem:[#allocation5 + $0x28] sm:$0xff]
    %v150 = vld [vmem:[#allocation5 + $0x30] sm:$0xff]
    %v151 = vld [vmem:[#allocation5 + $0x38] sm:$0xff]
    %v152 = vld [vmem:[#allocation5 + $0x40] sm:$0xff]
    %v153 = vld [vmem:[#allocation5 + $0x48] sm:$0xff]
    %v154 = vld [vmem:[#allocation5 + $0x50] sm:$0xff]
    %v155 = vld [vmem:[#allocation5 + $0x58] sm:$0xff]
    %v156 = vld [vmem:[#allocation5 + $0x60] sm:$0xff]
    %v157 = vld [vmem:[#allocation5 + $0x68] sm:$0xff]
    %v158 = vld [vmem:[#allocation5 + $0x70] sm:$0xff]
    %v159 = vld [vmem:[#allocation5 + $0x78] sm:$0xff]
    %v160 = vld [vmem:[#allocation5 + $0x80] sm:$0xff]
    %v161 = vld [vmem:[#allocation5 + $0x88] sm:$0xff]
    %v162 = vld [vmem:[#allocation5 + $0x90] sm:$0xff]
    %v163 = vld [vmem:[#allocation5 + $0x98] sm:$0xff]
    %v164 = vld [vmem:[#allocation5 + $0xa0] sm:$0xff]
    %v165 = vld [vmem:[#allocation5 + $0xa8] sm:$0xff]
    %v166 = vld [vmem:[#allocation5 + $0xb0] sm:$0xff]
    %v167 = vld [vmem:[#allocation5 + $0xb8] sm:$0xff]
    %v168 = vld [vmem:[#allocation5 + $0xc0] sm:$0xff]
    %v169 = vld [vmem:[#allocation5 + $0xc8] sm:$0xff]
    %v170 = vld [vmem:[#allocation5 + $0xd0] sm:$0xff]
    %v171 = vld [vmem:[#allocation5 + $0xd8] sm:$0xff]
    %v172 = vld [vmem:[#allocation5 + $0xe0] sm:$0xff]
    %v173 = vld [vmem:[#allocation5 + $0xe8] sm:$0xff]
    %v174 = vld [vmem:[#allocation5 + $0xf0] sm:$0xff]
    %v175 = vld [vmem:[#allocation5 + $0xf8] sm:$0xff]
    %v176 = vld [vmem:[#allocation5 + $0x100] sm:$0xff]
    %v177 = vld [vmem:[#allocation5 + $0x108] sm:$0xff]
    %v178 = vld [vmem:[#allocation5 + $0x110] sm:$0xff]
    %v179 = vld [vmem:[#allocation5 + $0x118] sm:$0xff]
    %v180 = vld [vmem:[#allocation5 + $0x120] sm:$0xff]
    %v181 = vld [vmem:[#allocation5 + $0x128] sm:$0xff]
    %v182 = vld [vmem:[#allocation5 + $0x130] sm:$0xff]
    %v183 = vld [vmem:[#allocation5 + $0x138] sm:$0xff]
    %v184 = vld [vmem:[#allocation5 + $0x140] sm:$0xff]
    %v185 = vld [vmem:[#allocation5 + $0x148] sm:$0xff]
    %v186 = vld [vmem:[#allocation5 + $0x150] sm:$0xff]
    %v187 = vld [vmem:[#allocation5 + $0x158] sm:$0xff]
    %v188 = vld [vmem:[#allocation5 + $0x160] sm:$0xff]
    %v189 = vld [vmem:[#allocation5 + $0x168] sm:$0xff]
    %v190 = vld [vmem:[#allocation5 + $0x170] sm:$0xff]
    %v191 = vld [vmem:[#allocation5 + $0x178] sm:$0xff]
    %v192 = vld [vmem:[#allocation5 + $0x180] sm:$0xff]
    %v193 = vld [vmem:[#allocation5 + $0x188] sm:$0xff]
    %v194 = vld [vmem:[#allocation5 + $0x190] sm:$0xff]
    %v195 = vld [vmem:[#allocation5 + $0x198] sm:$0xff]
    %v196 = vld [vmem:[#allocation5 + $0x1a0] sm:$0xff]
    %v197 = vld [vmem:[#allocation5 + $0x1a8] sm:$0xff]
    %v198 = vld [vmem:[#allocation5 + $0x1b0] sm:$0xff]
    %v199 = vld [vmem:[#allocation5 + $0x1b8] sm:$0xff]
    %v200 = vld [vmem:[#allocation5 + $0x1c0] sm:$0xff]
    %v201 = vld [vmem:[#allocation5 + $0x1c8] sm:$0xff]
    %v202 = vld [vmem:[#allocation5 + $0x1d0] sm:$0xff]
    %v203 = vld [vmem:[#allocation5 + $0x1d8] sm:$0xff]
    %v204 = vld [vmem:[#allocation5 + $0x1e0] sm:$0xff]
    %v205 = vld [vmem:[#allocation5 + $0x1e8] sm:$0xff]
    %v206 = vld [vmem:[#allocation5 + $0x1f0] sm:$0xff]
    %v207 = vld [vmem:[#allocation5 + $0x1f8] sm:$0xff]
    %v208 = vld [vmem:[#allocation5 + $0x200] sm:$0xff]
    %v209 = vld [vmem:[#allocation5 + $0x208] sm:$0xff]
    %v210 = vld [vmem:[#allocation5 + $0x210] sm:$0xff]
    %v211 = vld [vmem:[#allocation5 + $0x218] sm:$0xff]
    %v212 = vld [vmem:[#allocation5 + $0x220] sm:$0xff]
    %v213 = vld [vmem:[#allocation5 + $0x228] sm:$0xff]
    %v214 = vld [vmem:[#allocation5 + $0x230] sm:$0xff]
    %v215 = vld [vmem:[#allocation5 + $0x238] sm:$0xff]
    %v216 = vld [vmem:[#allocation5 + $0x240] sm:$0xff]
    %v217 = vld [vmem:[#allocation5 + $0x248] sm:$0xff]
    %v218 = vld [vmem:[#allocation5 + $0x250] sm:$0xff]
    %v219 = vld [vmem:[#allocation5 + $0x258] sm:$0xff]
    %v220 = vld [vmem:[#allocation5 + $0x260] sm:$0xff]
    %v221 = vld [vmem:[#allocation5 + $0x268] sm:$0xff]
    %v222 = vld [vmem:[#allocation5 + $0x270] sm:$0xff]
    %v223 = vld [vmem:[#allocation5 + $0x278] sm:$0xff]
    %v224 = vld [vmem:[#allocation5 + $0x280] sm:$0xff]
    %v225 = vld [vmem:[#allocation5 + $0x288] sm:$0xff]
    %v226 = vld [vmem:[#allocation5 + $0x290] sm:$0xff]
    %v227 = vld [vmem:[#allocation5 + $0x298] sm:$0xff]
    %v228 = vld [vmem:[#allocation5 + $0x2a0] sm:$0xff]
    %v229 = vld [vmem:[#allocation5 + $0x2a8] sm:$0xff]
    %v230 = vld [vmem:[#allocation5 + $0x2b0] sm:$0xff]
    %v231 = vld [vmem:[#allocation5 + $0x2b8] sm:$0xff]
    %v232 = vld [vmem:[#allocation5 + $0x2c0] sm:$0xff]
    %v233 = vld [vmem:[#allocation5 + $0x2c8] sm:$0xff]
    %v234 = vld [vmem:[#allocation5 + $0x2d0] sm:$0xff]
    %v235 = vld [vmem:[#allocation5 + $0x2d8] sm:$0xff]
    %v236 = vld [vmem:[#allocation5 + $0x2e0] sm:$0xff]
    %v237 = vld [vmem:[#allocation5 + $0x2e8] sm:$0xff]
    %v238 = vld [vmem:[#allocation5 + $0x2f0] sm:$0xff]
    %v239 = vld [vmem:[#allocation5 + $0x2f8] sm:$0xff]
    %v240 = vld [vmem:[#allocation5 + $0x300] sm:$0xff]
    %v241 = vld [vmem:[#allocation5 + $0x308] sm:$0xff]
    %v242 = vld [vmem:[#allocation7] sm:$0x3]
    %v244 = vperm.slane %v242, 0
    %v245 = vperm.slane %v242, 1
    %v346 = vunpack.c.l.b16 %v144
    %v347 = vunpack.c.h.b16 %v144
    %v348 = vunpack.c.l.b16 %v145
    %v349 = vunpack.c.h.b16 %v145
    %v350 = vunpack.c.l.b16 %v146
    %v351 = vunpack.c.h.b16 %v146
    %v352 = vunpack.c.l.b16 %v147
    %v353 = vunpack.c.h.b16 %v147
    %v354 = vunpack.c.l.b16 %v148
    %v355 = vunpack.c.h.b16 %v148
    %v356 = vunpack.c.l.b16 %v149
    %v357 = vunpack.c.h.b16 %v149
    %v358 = vunpack.c.l.b16 %v150
    %v359 = vunpack.c.h.b16 %v150
    %v360 = vunpack.c.l.b16 %v151
    %v361 = vunpack.c.h.b16 %v151
    %v362 = vunpack.c.l.b16 %v152
    %v363 = vunpack.c.h.b16 %v152
    %v364 = vunpack.c.l.b16 %v153
    %v365 = vunpack.c.h.b16 %v153
    %v366 = vunpack.c.l.b16 %v154
    %v367 = vunpack.c.h.b16 %v154
    %v368 = vunpack.c.l.b16 %v155
    %v369 = vunpack.c.h.b16 %v155
    %v370 = vunpack.c.l.b16 %v156
    %v371 = vunpack.c.h.b16 %v156
    %v372 = vunpack.c.l.b16 %v157
    %v373 = vunpack.c.h.b16 %v157
    %v374 = vunpack.c.l.b16 %v158
    %v375 = vunpack.c.h.b16 %v158
    %v376 = vunpack.c.l.b16 %v159
    %v377 = vunpack.c.h.b16 %v159
    %v378 = vunpack.c.l.b16 %v160
    %v379 = vunpack.c.h.b16 %v160
    %v380 = vunpack.c.l.b16 %v161
    %v381 = vunpack.c.h.b16 %v161
    %v382 = vunpack.c.l.b16 %v162
    %v383 = vunpack.c.h.b16 %v162
    %v384 = vunpack.c.l.b16 %v163
    %v385 = vunpack.c.h.b16 %v163
    %v386 = vunpack.c.l.b16 %v164
    %v387 = vunpack.c.h.b16 %v164
    %v388 = vunpack.c.l.b16 %v165
    %v389 = vunpack.c.h.b16 %v165
    %v390 = vunpack.c.l.b16 %v166
    %v391 = vunpack.c.h.b16 %v166
    %v392 = vunpack.c.l.b16 %v167
    %v393 = vunpack.c.h.b16 %v167
    %v394 = vunpack.c.l.b16 %v168
    %v395 = vunpack.c.h.b16 %v168
    %v396 = vunpack.c.l.b16 %v169
    %v397 = vunpack.c.h.b16 %v169
    %v398 = vunpack.c.l.b16 %v170
    %v399 = vunpack.c.h.b16 %v170
    %v400 = vunpack.c.l.b16 %v171
    %v401 = vunpack.c.h.b16 %v171
    %v402 = vunpack.c.l.b16 %v172
    %v403 = vunpack.c.h.b16 %v172
    %v404 = vunpack.c.l.b16 %v173
    %v405 = vunpack.c.h.b16 %v173
    %v406 = vunpack.c.l.b16 %v174
    %v407 = vunpack.c.h.b16 %v174
    %v408 = vunpack.c.l.b16 %v175
    %v409 = vunpack.c.h.b16 %v175
    %v410 = vunpack.c.l.b16 %v176
    %v411 = vunpack.c.h.b16 %v176
    %v412 = vunpack.c.l.b16 %v177
    %v413 = vunpack.c.h.b16 %v177
    %v414 = vunpack.c.l.b16 %v178
    %v415 = vunpack.c.h.b16 %v178
    %v416 = vunpack.c.l.b16 %v179
    %v417 = vunpack.c.h.b16 %v179
    %v418 = vunpack.c.l.b16 %v180
    %v419 = vunpack.c.h.b16 %v180
    %v420 = vunpack.c.l.b16 %v181
    %v421 = vunpack.c.h.b16 %v181
    %v422 = vunpack.c.l.b16 %v182
    %v423 = vunpack.c.h.b16 %v182
    %v424 = vunpack.c.l.b16 %v183
    %v425 = vunpack.c.h.b16 %v183
    %v426 = vunpack.c.l.b16 %v184
    %v427 = vunpack.c.h.b16 %v184
    %v428 = vunpack.c.l.b16 %v185
    %v429 = vunpack.c.h.b16 %v185
    %v430 = vunpack.c.l.b16 %v186
    %v431 = vunpack.c.h.b16 %v186
    %v432 = vunpack.c.l.b16 %v187
    %v433 = vunpack.c.h.b16 %v187
    %v434 = vunpack.c.l.b16 %v188
    %v435 = vunpack.c.h.b16 %v188
    %v436 = vunpack.c.l.b16 %v189
    %v437 = vunpack.c.h.b16 %v189
    %v438 = vunpack.c.l.b16 %v190
    %v439 = vunpack.c.h.b16 %v190
    %v440 = vunpack.c.l.b16 %v191
    %v441 = vunpack.c.h.b16 %v191
    %v442 = vunpack.c.l.b16 %v192
    %v443 = vunpack.c.h.b16 %v192
    %v444 = vunpack.c.l.b16 %v193
    %v445 = vunpack.c.h.b16 %v193
    %v446 = vunpack.c.l.b16 %v194
    %v447 = vunpack.c.h.b16 %v194
    %v448 = vunpack.c.l.b16 %v195
    %v449 = vunpack.c.h.b16 %v195
    %v450 = vunpack.c.l.b16 %v196
    %v451 = vunpack.c.h.b16 %v196
    %v452 = vunpack.c.l.b16 %v197
    %v453 = vunpack.c.h.b16 %v197
    %v454 = vunpack.c.l.b16 %v198
    %v455 = vunpack.c.h.b16 %v198
    %v456 = vunpack.c.l.b16 %v199
    %v457 = vunpack.c.h.b16 %v199
    %v458 = vunpack.c.l.b16 %v200
    %v459 = vunpack.c.h.b16 %v200
    %v460 = vunpack.c.l.b16 %v201
    %v461 = vunpack.c.h.b16 %v201
    %v462 = vunpack.c.l.b16 %v202
    %v463 = vunpack.c.h.b16 %v202
    %v464 = vunpack.c.l.b16 %v203
    %v465 = vunpack.c.h.b16 %v203
    %v466 = vunpack.c.l.b16 %v204
    %v467 = vunpack.c.h.b16 %v204
    %v468 = vunpack.c.l.b16 %v205
    %v469 = vunpack.c.h.b16 %v205
    %v470 = vunpack.c.l.b16 %v206
    %v471 = vunpack.c.h.b16 %v206
    %v472 = vunpack.c.l.b16 %v207
    %v473 = vunpack.c.h.b16 %v207
    %v474 = vunpack.c.l.b16 %v208
    %v475 = vunpack.c.h.b16 %v208
    %v476 = vunpack.c.l.b16 %v209
    %v477 = vunpack.c.h.b16 %v209
    %v478 = vunpack.c.l.b16 %v210
    %v479 = vunpack.c.h.b16 %v210
    %v480 = vunpack.c.l.b16 %v211
    %v481 = vunpack.c.h.b16 %v211
    %v482 = vunpack.c.l.b16 %v212
    %v483 = vunpack.c.h.b16 %v212
    %v484 = vunpack.c.l.b16 %v213
    %v485 = vunpack.c.h.b16 %v213
    %v486 = vunpack.c.l.b16 %v214
    %v487 = vunpack.c.h.b16 %v214
    %v488 = vunpack.c.l.b16 %v215
    %v489 = vunpack.c.h.b16 %v215
    %v490 = vunpack.c.l.b16 %v216
    %v491 = vunpack.c.h.b16 %v216
    %v492 = vunpack.c.l.b16 %v217
    %v493 = vunpack.c.h.b16 %v217
    %v494 = vunpack.c.l.b16 %v218
    %v495 = vunpack.c.h.b16 %v218
    %v496 = vunpack.c.l.b16 %v219
    %v497 = vunpack.c.h.b16 %v219
    %v498 = vunpack.c.l.b16 %v220
    %v499 = vunpack.c.h.b16 %v220
    %v500 = vunpack.c.l.b16 %v221
    %v501 = vunpack.c.h.b16 %v221
    %v502 = vunpack.c.l.b16 %v222
    %v503 = vunpack.c.h.b16 %v222
    %v504 = vunpack.c.l.b16 %v223
    %v505 = vunpack.c.h.b16 %v223
    %v506 = vunpack.c.l.b16 %v224
    %v507 = vunpack.c.h.b16 %v224
    %v508 = vunpack.c.l.b16 %v225
    %v509 = vunpack.c.h.b16 %v225
    %v510 = vunpack.c.l.b16 %v226
    %v511 = vunpack.c.h.b16 %v226
    %v512 = vunpack.c.l.b16 %v227
    %v513 = vunpack.c.h.b16 %v227
    %v514 = vunpack.c.l.b16 %v228
    %v515 = vunpack.c.h.b16 %v228
    %v516 = vunpack.c.l.b16 %v229
    %v517 = vunpack.c.h.b16 %v229
    %v518 = vunpack.c.l.b16 %v230
    %v519 = vunpack.c.h.b16 %v230
    %v520 = vunpack.c.l.b16 %v231
    %v521 = vunpack.c.h.b16 %v231
    %v522 = vunpack.c.l.b16 %v232
    %v523 = vunpack.c.h.b16 %v232
    %v524 = vunpack.c.l.b16 %v233
    %v525 = vunpack.c.h.b16 %v233
    %v526 = vunpack.c.l.b16 %v234
    %v527 = vunpack.c.h.b16 %v234
    %v528 = vunpack.c.l.b16 %v235
    %v529 = vunpack.c.h.b16 %v235
    %v530 = vunpack.c.l.b16 %v236
    %v531 = vunpack.c.h.b16 %v236
    %v532 = vunpack.c.l.b16 %v237
    %v533 = vunpack.c.h.b16 %v237
    %v534 = vunpack.c.l.b16 %v238
    %v535 = vunpack.c.h.b16 %v238
    %v536 = vunpack.c.l.b16 %v239
    %v537 = vunpack.c.h.b16 %v239
    %v538 = vunpack.c.l.b16 %v240
    %v539 = vunpack.c.h.b16 %v240
    %v540 = vunpack.c.l.b16 %v241
    %v541 = vunpack.c.h.b16 %v241
    %v542 = vpack.c.b16 %v348, %v346
    %v543 = vpack.c.b16 %v349, %v347
    %v544 = vpack.c.b16 %v352, %v350
    %v545 = vpack.c.b16 %v353, %v351
    %v546 = vpack.c.b16 %v356, %v354
    %v547 = vpack.c.b16 %v357, %v355
    %v548 = vpack.c.b16 %v360, %v358
    %v549 = vpack.c.b16 %v361, %v359
    %v550 = vpack.c.b16 %v364, %v362
    %v551 = vpack.c.b16 %v365, %v363
    %v552 = vpack.c.b16 %v368, %v366
    %v553 = vpack.c.b16 %v369, %v367
    %v554 = vpack.c.b16 %v372, %v370
    %v555 = vpack.c.b16 %v373, %v371
    %v556 = vpack.c.b16 %v376, %v374
    %v557 = vpack.c.b16 %v377, %v375
    %v558 = vpack.c.b16 %v380, %v378
    %v559 = vpack.c.b16 %v381, %v379
    %v560 = vpack.c.b16 %v384, %v382
    %v561 = vpack.c.b16 %v385, %v383
    %v562 = vpack.c.b16 %v388, %v386
    %v563 = vpack.c.b16 %v389, %v387
    %v564 = vpack.c.b16 %v392, %v390
    %v565 = vpack.c.b16 %v393, %v391
    %v566 = vpack.c.b16 %v396, %v394
    %v567 = vpack.c.b16 %v397, %v395
    %v568 = vpack.c.b16 %v400, %v398
    %v569 = vpack.c.b16 %v401, %v399
    %v570 = vpack.c.b16 %v404, %v402
    %v571 = vpack.c.b16 %v405, %v403
    %v572 = vpack.c.b16 %v408, %v406
    %v573 = vpack.c.b16 %v409, %v407
    %v574 = vpack.c.b16 %v412, %v410
    %v575 = vpack.c.b16 %v413, %v411
    %v576 = vpack.c.b16 %v416, %v414
    %v577 = vpack.c.b16 %v417, %v415
    %v578 = vpack.c.b16 %v420, %v418
    %v579 = vpack.c.b16 %v421, %v419
    %v580 = vpack.c.b16 %v424, %v422
    %v581 = vpack.c.b16 %v425, %v423
    %v582 = vpack.c.b16 %v428, %v426
    %v583 = vpack.c.b16 %v429, %v427
    %v584 = vpack.c.b16 %v432, %v430
    %v585 = vpack.c.b16 %v433, %v431
    %v586 = vpack.c.b16 %v436, %v434
    %v587 = vpack.c.b16 %v437, %v435
    %v588 = vpack.c.b16 %v440, %v438
    %v589 = vpack.c.b16 %v441, %v439
    %v590 = vpack.c.b16 %v444, %v442
    %v591 = vpack.c.b16 %v445, %v443
    %v592 = vpack.c.b16 %v448, %v446
    %v593 = vpack.c.b16 %v449, %v447
    %v594 = vpack.c.b16 %v452, %v450
    %v595 = vpack.c.b16 %v453, %v451
    %v596 = vpack.c.b16 %v456, %v454
    %v597 = vpack.c.b16 %v457, %v455
    %v598 = vpack.c.b16 %v460, %v458
    %v599 = vpack.c.b16 %v461, %v459
    %v600 = vpack.c.b16 %v464, %v462
    %v601 = vpack.c.b16 %v465, %v463
    %v602 = vpack.c.b16 %v468, %v466
    %v603 = vpack.c.b16 %v469, %v467
    %v604 = vpack.c.b16 %v472, %v470
    %v605 = vpack.c.b16 %v473, %v471
    %v606 = vpack.c.b16 %v476, %v474
    %v607 = vpack.c.b16 %v477, %v475
    %v608 = vpack.c.b16 %v480, %v478
    %v609 = vpack.c.b16 %v481, %v479
    %v610 = vpack.c.b16 %v484, %v482
    %v611 = vpack.c.b16 %v485, %v483
    %v612 = vpack.c.b16 %v488, %v486
    %v613 = vpack.c.b16 %v489, %v487
    %v614 = vpack.c.b16 %v492, %v490
    %v615 = vpack.c.b16 %v493, %v491
    %v616 = vpack.c.b16 %v496, %v494
    %v617 = vpack.c.b16 %v497, %v495
    %v618 = vpack.c.b16 %v500, %v498
    %v619 = vpack.c.b16 %v501, %v499
    %v620 = vpack.c.b16 %v504, %v502
    %v621 = vpack.c.b16 %v505, %v503
    %v622 = vpack.c.b16 %v508, %v506
    %v623 = vpack.c.b16 %v509, %v507
    %v624 = vpack.c.b16 %v512, %v510
    %v625 = vpack.c.b16 %v513, %v511
    %v626 = vpack.c.b16 %v516, %v514
    %v627 = vpack.c.b16 %v517, %v515
    %v628 = vpack.c.b16 %v520, %v518
    %v629 = vpack.c.b16 %v521, %v519
    %v630 = vpack.c.b16 %v524, %v522
    %v631 = vpack.c.b16 %v525, %v523
    %v632 = vpack.c.b16 %v528, %v526
    %v633 = vpack.c.b16 %v529, %v527
    %v634 = vpack.c.b16 %v532, %v530
    %v635 = vpack.c.b16 %v533, %v531
    %v636 = vpack.c.b16 %v536, %v534
    %v637 = vpack.c.b16 %v537, %v535
    %v638 = vpack.c.b16 %v540, %v538
    %v639 = vpack.c.b16 %v541, %v539
    %vm738 = vcmask 130048
    %v740 = vsel %vm738, %v143, 0
    %742 = vmatpush.bf16.msra.mxu0 %v556
    %743 = vmatpush.bf16.msra.mxu0 %v554
    %744 = vmatpush.bf16.msra.mxu0 %v552
    %745 = vmatpush.bf16.msra.mxu0 %v550
    %746 = vmatpush.bf16.msra.mxu0 %v548
    %747 = vmatpush.bf16.msra.mxu0 %v546
    %748 = vmatpush.bf16.msra.mxu0 %v544
    %749 = vmatpush.bf16.msra.mxu0 %v542
    %750 = vmatmul.bf16.gmra.mxu0 %v137
    %v751 = vpop.f32.mrf.mxu0
    %v752 = vadd.f32 %v244, %v751
    %v753 = vpop.f32.mrf.mxu0
    %754 = vdwg.mxu0
    %755 = vmatpush.bf16.msra.mxu0 %v572
    %756 = vmatpush.bf16.msra.mxu0 %v570
    %757 = vmatpush.bf16.msra.mxu0 %v568
    %758 = vmatpush.bf16.msra.mxu0 %v566
    %759 = vmatpush.bf16.msra.mxu0 %v564
    %760 = vmatpush.bf16.msra.mxu0 %v562
    %761 = vmatpush.bf16.msra.mxu0 %v560
    %762 = vmatpush.bf16.msra.mxu0 %v558
    %763 = vmatmul.bf16.gmra.mxu0 %v138
    %v764 = vpop.f32.mrf.mxu0
    %v765 = vadd.f32 %v752, %v764
    %v766 = vpop.f32.mrf.mxu0
    %767 = vdwg.mxu0
    %768 = vmatpush.bf16.msra.mxu0 %v588
    %769 = vmatpush.bf16.msra.mxu0 %v586
    %770 = vmatpush.bf16.msra.mxu0 %v584
    %771 = vmatpush.bf16.msra.mxu0 %v582
    %772 = vmatpush.bf16.msra.mxu0 %v580
    %773 = vmatpush.bf16.msra.mxu0 %v578
    %774 = vmatpush.bf16.msra.mxu0 %v576
    %775 = vmatpush.bf16.msra.mxu0 %v574
    %776 = vmatmul.bf16.gmra.mxu0 %v139
    %v777 = vpop.f32.mrf.mxu0
    %v778 = vadd.f32 %v765, %v777
    %v779 = vpop.f32.mrf.mxu0
    %780 = vdwg.mxu0
    %781 = vmatpush.bf16.msra.mxu0 %v604
    %782 = vmatpush.bf16.msra.mxu0 %v602
    %783 = vmatpush.bf16.msra.mxu0 %v600
    %784 = vmatpush.bf16.msra.mxu0 %v598
    %785 = vmatpush.bf16.msra.mxu0 %v596
    %786 = vmatpush.bf16.msra.mxu0 %v594
    %787 = vmatpush.bf16.msra.mxu0 %v592
    %788 = vmatpush.bf16.msra.mxu0 %v590
    %789 = vmatmul.bf16.gmra.mxu0 %v140
    %v790 = vpop.f32.mrf.mxu0
    %v791 = vadd.f32 %v778, %v790
    %v792 = vpop.f32.mrf.mxu0
    %793 = vdwg.mxu0
    %794 = vmatpush.bf16.msra.mxu0 %v620
    %795 = vmatpush.bf16.msra.mxu0 %v618
    %796 = vmatpush.bf16.msra.mxu0 %v616
    %797 = vmatpush.bf16.msra.mxu0 %v614
    %798 = vmatpush.bf16.msra.mxu0 %v612
    %799 = vmatpush.bf16.msra.mxu0 %v610
    %800 = vmatpush.bf16.msra.mxu0 %v608
    %801 = vmatpush.bf16.msra.mxu0 %v606
    %802 = vmatmul.bf16.gmra.mxu0 %v141
    %v803 = vpop.f32.mrf.mxu0
    %v804 = vadd.f32 %v791, %v803
    %v805 = vpop.f32.mrf.mxu0
    %806 = vdwg.mxu0
    %807 = vmatpush.bf16.msra.mxu0 %v636
    %808 = vmatpush.bf16.msra.mxu0 %v634
    %809 = vmatpush.bf16.msra.mxu0 %v632
    %810 = vmatpush.bf16.msra.mxu0 %v630
    %811 = vmatpush.bf16.msra.mxu0 %v628
    %812 = vmatpush.bf16.msra.mxu0 %v626
    %813 = vmatpush.bf16.msra.mxu0 %v624
    %814 = vmatpush.bf16.msra.mxu0 %v622
    %815 = vmatmul.bf16.gmra.mxu0 %v142
    %v816 = vpop.f32.mrf.mxu0
    %v817 = vadd.f32 %v804, %v816
    %v818 = vpop.f32.mrf.mxu0
    %819 = vdwg.mxu0
    %820 = vmatpush.bf16.msra.mxu0 0
    %821 = vmatpush.bf16.msra.mxu0 0
    %822 = vmatpush.bf16.msra.mxu0 0
    %823 = vmatpush.bf16.msra.mxu0 0
    %824 = vmatpush.bf16.msra.mxu0 0
    %825 = vmatpush.bf16.msra.mxu0 0
    %826 = vmatpush.bf16.msra.mxu0 0
    %827 = vmatpush.bf16.msra.mxu0 %v638
    %828 = vmatmul.bf16.gmra.mxu0 %v740
    %v829 = vpop.f32.mrf.mxu0
    %v830 = vadd.f32 %v817, %v829
    %v831 = vpop.f32.mrf.mxu0
    %832 = vdwg.mxu0
    %833 = vmatpush.bf16.msra.mxu0 %v557
    %834 = vmatpush.bf16.msra.mxu0 %v555
    %835 = vmatpush.bf16.msra.mxu0 %v553
    %836 = vmatpush.bf16.msra.mxu0 %v551
    %837 = vmatpush.bf16.msra.mxu0 %v549
    %838 = vmatpush.bf16.msra.mxu0 %v547
    %839 = vmatpush.bf16.msra.mxu0 %v545
    %840 = vmatpush.bf16.msra.mxu0 %v543
    %841 = vmatmul.bf16.gmra.mxu0 %v137
    %v842 = vpop.f32.mrf.mxu0
    %v843 = vadd.f32 %v245, %v842
    %v844 = vpop.f32.mrf.mxu0
    %845 = vdwg.mxu0
    %846 = vmatpush.bf16.msra.mxu0 %v573
    %847 = vmatpush.bf16.msra.mxu0 %v571
    %848 = vmatpush.bf16.msra.mxu0 %v569
    %849 = vmatpush.bf16.msra.mxu0 %v567
    %850 = vmatpush.bf16.msra.mxu0 %v565
    %851 = vmatpush.bf16.msra.mxu0 %v563
    %852 = vmatpush.bf16.msra.mxu0 %v561
    %853 = vmatpush.bf16.msra.mxu0 %v559
    %854 = vmatmul.bf16.gmra.mxu0 %v138
    %v855 = vpop.f32.mrf.mxu0
    %v856 = vadd.f32 %v843, %v855
    %v857 = vpop.f32.mrf.mxu0
    %858 = vdwg.mxu0
    %859 = vmatpush.bf16.msra.mxu0 %v589
    %860 = vmatpush.bf16.msra.mxu0 %v587
    %861 = vmatpush.bf16.msra.mxu0 %v585
    %862 = vmatpush.bf16.msra.mxu0 %v583
    %863 = vmatpush.bf16.msra.mxu0 %v581
    %864 = vmatpush.bf16.msra.mxu0 %v579
    %865 = vmatpush.bf16.msra.mxu0 %v577
    %866 = vmatpush.bf16.msra.mxu0 %v575
    %867 = vmatmul.bf16.gmra.mxu0 %v139
    %v868 = vpop.f32.mrf.mxu0
    %v869 = vadd.f32 %v856, %v868
    %v870 = vpop.f32.mrf.mxu0
    %871 = vdwg.mxu0
    %872 = vmatpush.bf16.msra.mxu0 %v605
    %873 = vmatpush.bf16.msra.mxu0 %v603
    %874 = vmatpush.bf16.msra.mxu0 %v601
    %875 = vmatpush.bf16.msra.mxu0 %v599
    %876 = vmatpush.bf16.msra.mxu0 %v597
    %877 = vmatpush.bf16.msra.mxu0 %v595
    %878 = vmatpush.bf16.msra.mxu0 %v593
    %879 = vmatpush.bf16.msra.mxu0 %v591
    %880 = vmatmul.bf16.gmra.mxu0 %v140
    %v881 = vpop.f32.mrf.mxu0
    %v882 = vadd.f32 %v869, %v881
    %v883 = vpop.f32.mrf.mxu0
    %884 = vdwg.mxu0
    %885 = vmatpush.bf16.msra.mxu0 %v621
    %886 = vmatpush.bf16.msra.mxu0 %v619
    %887 = vmatpush.bf16.msra.mxu0 %v617
    %888 = vmatpush.bf16.msra.mxu0 %v615
    %889 = vmatpush.bf16.msra.mxu0 %v613
    %890 = vmatpush.bf16.msra.mxu0 %v611
    %891 = vmatpush.bf16.msra.mxu0 %v609
    %892 = vmatpush.bf16.msra.mxu0 %v607
    %893 = vmatmul.bf16.gmra.mxu0 %v141
    %v894 = vpop.f32.mrf.mxu0
    %v895 = vadd.f32 %v882, %v894
    %v896 = vpop.f32.mrf.mxu0
    %897 = vdwg.mxu0
    %898 = vmatpush.bf16.msra.mxu0 %v637
    %899 = vmatpush.bf16.msra.mxu0 %v635
    %900 = vmatpush.bf16.msra.mxu0 %v633
    %901 = vmatpush.bf16.msra.mxu0 %v631
    %902 = vmatpush.bf16.msra.mxu0 %v629
    %903 = vmatpush.bf16.msra.mxu0 %v627
    %904 = vmatpush.bf16.msra.mxu0 %v625
    %905 = vmatpush.bf16.msra.mxu0 %v623
    %906 = vmatmul.bf16.gmra.mxu0 %v142
    %v907 = vpop.f32.mrf.mxu0
    %v908 = vadd.f32 %v895, %v907
    %v909 = vpop.f32.mrf.mxu0
    %910 = vdwg.mxu0
    %911 = vmatpush.bf16.msra.mxu0 0
    %912 = vmatpush.bf16.msra.mxu0 0
    %913 = vmatpush.bf16.msra.mxu0 0
    %914 = vmatpush.bf16.msra.mxu0 0
    %915 = vmatpush.bf16.msra.mxu0 0
    %916 = vmatpush.bf16.msra.mxu0 0
    %917 = vmatpush.bf16.msra.mxu0 0
    %918 = vmatpush.bf16.msra.mxu0 %v639
    %919 = vmatmul.bf16.gmra.mxu0 %v740
    %v920 = vpop.f32.mrf.mxu0
    %v921 = vadd.f32 %v908, %v920
    %v922 = vpop.f32.mrf.mxu0
    %923 = vdwg.mxu0
    %v924 = vmax.f32 %v830, 0.0
    %v925 = vmax.f32 %v921, 0.0
    %v926 = vpack.c.bf16 %v924, %v924
    %v927 = vpack.c.bf16 %v925, %v925
    %v928 = vld [vmem:[%s3] sm:$0xf]
    %v929 = vld [vmem:[%s3 + $0x4] sm:$0xf]
    %v930 = vld [vmem:[%s3 + $0x8] sm:$0xf]
    %v931 = vld [vmem:[%s3 + $0xc] sm:$0xf]
    %v932 = vld [vmem:[%s3 + $0x10] sm:$0xf]
    %v933 = vld [vmem:[%s3 + $0x14] sm:$0xf]
    %v934 = vld [vmem:[%s3 + $0x18] sm:$0xf]
    %v935 = vld [vmem:[%s3 + $0x1c] sm:$0xf]
    %v936 = vld [vmem:[%s3 + $0x20] sm:$0xf]
    %v937 = vld [vmem:[%s3 + $0x24] sm:$0xf]
    %v938 = vld [vmem:[%s3 + $0x28] sm:$0xf]
    %v939 = vld [vmem:[%s3 + $0x2c] sm:$0xf]
    %v940 = vld [vmem:[%s3 + $0x30] sm:$0xf]
    %v941 = vld [vmem:[%s3 + $0x34] sm:$0xf]
    %v942 = vld [vmem:[%s3 + $0x38] sm:$0xf]
    %v943 = vld [vmem:[%s3 + $0x3c] sm:$0xf]
    %v944 = vld [vmem:[%s3 + $0x40] sm:$0xf]
    %v945 = vld [vmem:[%s3 + $0x44] sm:$0xf]
    %v946 = vld [vmem:[%s3 + $0x48] sm:$0xf]
    %v947 = vld [vmem:[%s3 + $0x4c] sm:$0xf]
    %v948 = vld [vmem:[%s3 + $0x50] sm:$0xf]
    %v949 = vld [vmem:[%s3 + $0x54] sm:$0xf]
    %v950 = vld [vmem:[%s3 + $0x58] sm:$0xf]
    %v951 = vld [vmem:[%s3 + $0x5c] sm:$0xf]
    %v952 = vld [vmem:[%s3 + $0x60] sm:$0xf]
    %v953 = vld [vmem:[%s3 + $0x64] sm:$0xf]
    %v954 = vld [vmem:[%s3 + $0x68] sm:$0xf]
    %v955 = vld [vmem:[%s3 + $0x6c] sm:$0xf]
    %v956 = vld [vmem:[%s3 + $0x70] sm:$0xf]
    %v957 = vld [vmem:[%s3 + $0x74] sm:$0xf]
    %v958 = vld [vmem:[%s3 + $0x78] sm:$0xf]
    %v959 = vld [vmem:[%s3 + $0x7c] sm:$0xf]
    %v960 = vld [vmem:[#allocation8] sm:$0x1]
    %v962 = vperm.slane %v960, 0
    %v996 = vunpack.c.l.b16 %v928
    %v997 = vunpack.c.l.b16 %v929
    %v998 = vunpack.c.l.b16 %v930
    %v999 = vunpack.c.l.b16 %v931
    %v1000 = vunpack.c.l.b16 %v932
    %v1001 = vunpack.c.l.b16 %v933
    %v1002 = vunpack.c.l.b16 %v934
    %v1003 = vunpack.c.l.b16 %v935
    %v1004 = vunpack.c.l.b16 %v936
    %v1005 = vunpack.c.l.b16 %v937
    %v1006 = vunpack.c.l.b16 %v938
    %v1007 = vunpack.c.l.b16 %v939
    %v1008 = vunpack.c.l.b16 %v940
    %v1009 = vunpack.c.l.b16 %v941
    %v1010 = vunpack.c.l.b16 %v942
    %v1011 = vunpack.c.l.b16 %v943
    %v1012 = vunpack.c.l.b16 %v944
    %v1013 = vunpack.c.l.b16 %v945
    %v1014 = vunpack.c.l.b16 %v946
    %v1015 = vunpack.c.l.b16 %v947
    %v1016 = vunpack.c.l.b16 %v948
    %v1017 = vunpack.c.l.b16 %v949
    %v1018 = vunpack.c.l.b16 %v950
    %v1019 = vunpack.c.l.b16 %v951
    %v1020 = vunpack.c.l.b16 %v952
    %v1021 = vunpack.c.l.b16 %v953
    %v1022 = vunpack.c.l.b16 %v954
    %v1023 = vunpack.c.l.b16 %v955
    %v1024 = vunpack.c.l.b16 %v956
    %v1025 = vunpack.c.l.b16 %v957
    %v1026 = vunpack.c.l.b16 %v958
    %v1027 = vunpack.c.l.b16 %v959
    %v1028 = vpack.c.b16 %v997, %v996
    %v1029 = vpack.c.b16 %v999, %v998
    %v1030 = vpack.c.b16 %v1001, %v1000
    %v1031 = vpack.c.b16 %v1003, %v1002
    %v1032 = vpack.c.b16 %v1005, %v1004
    %v1033 = vpack.c.b16 %v1007, %v1006
    %v1034 = vpack.c.b16 %v1009, %v1008
    %v1035 = vpack.c.b16 %v1011, %v1010
    %v1036 = vpack.c.b16 %v1013, %v1012
    %v1037 = vpack.c.b16 %v1015, %v1014
    %v1038 = vpack.c.b16 %v1017, %v1016
    %v1039 = vpack.c.b16 %v1019, %v1018
    %v1040 = vpack.c.b16 %v1021, %v1020
    %v1041 = vpack.c.b16 %v1023, %v1022
    %v1042 = vpack.c.b16 %v1025, %v1024
    %v1043 = vpack.c.b16 %v1027, %v1026
    %1060 = vmatpush.bf16.msra.mxu0 %v1035
    %1061 = vmatpush.bf16.msra.mxu0 %v1034
    %1062 = vmatpush.bf16.msra.mxu0 %v1033
    %1063 = vmatpush.bf16.msra.mxu0 %v1032
    %1064 = vmatpush.bf16.msra.mxu0 %v1031
    %1065 = vmatpush.bf16.msra.mxu0 %v1030
    %1066 = vmatpush.bf16.msra.mxu0 %v1029
    %1067 = vmatpush.bf16.msra.mxu0 %v1028
    %1068 = vmatmul.bf16.gmra.mxu0 %v926
    %v1069 = vpop.f32.mrf.mxu0
    %v1070 = vadd.f32 %v962, %v1069
    %v1071 = vpop.f32.mrf.mxu0
    %1072 = vdwg.mxu0
    %1073 = vmatpush.bf16.msra.mxu0 %v1043
    %1074 = vmatpush.bf16.msra.mxu0 %v1042
    %1075 = vmatpush.bf16.msra.mxu0 %v1041
    %1076 = vmatpush.bf16.msra.mxu0 %v1040
    %1077 = vmatpush.bf16.msra.mxu0 %v1039
    %1078 = vmatpush.bf16.msra.mxu0 %v1038
    %1079 = vmatpush.bf16.msra.mxu0 %v1037
    %1080 = vmatpush.bf16.msra.mxu0 %v1036
    %1081 = vmatmul.bf16.gmra.mxu0 %v927
    %v1082 = vpop.f32.mrf.mxu0
    %v1083 = vadd.f32 %v1070, %v1082
    %v1084 = vpop.f32.mrf.mxu0
    %1085 = vdwg.mxu0
    %v1086 = vmax.f32 %v1083, 0.0
    %v1087 = vpack.c.bf16 %v1086, %v1086
    %v1088 = vld [vmem:[%s5] sm:$0xf]
    %v1089 = vld [vmem:[%s5 + $0x4] sm:$0xf]
    %v1090 = vld [vmem:[%s5 + $0x8] sm:$0xf]
    %v1091 = vld [vmem:[%s5 + $0xc] sm:$0xf]
    %v1092 = vld [vmem:[%s5 + $0x10] sm:$0xf]
    %v1093 = vld [vmem:[%s5 + $0x14] sm:$0xf]
    %v1094 = vld [vmem:[%s5 + $0x18] sm:$0xf]
    %v1095 = vld [vmem:[%s5 + $0x1c] sm:$0xf]
    %v1096 = vld [vmem:[%s5 + $0x20] sm:$0xf]
    %v1097 = vld [vmem:[%s5 + $0x24] sm:$0xf]
    %v1098 = vld [vmem:[%s5 + $0x28] sm:$0xf]
    %v1099 = vld [vmem:[%s5 + $0x2c] sm:$0xf]
    %v1100 = vld [vmem:[%s5 + $0x30] sm:$0xf]
    %v1101 = vld [vmem:[%s5 + $0x34] sm:$0xf]
    %v1102 = vld [vmem:[%s5 + $0x38] sm:$0xf]
    %v1103 = vld [vmem:[%s5 + $0x3c] sm:$0xf]
    %v1104 = vld [vmem:[#allocation10] sm:$0x1]
    %v1106 = vperm.slane %v1104, 0
    %v1124 = vunpack.c.l.b16 %v1088
    %v1125 = vunpack.c.l.b16 %v1089
    %v1126 = vunpack.c.l.b16 %v1090
    %v1127 = vunpack.c.l.b16 %v1091
    %v1128 = vunpack.c.l.b16 %v1092
    %v1129 = vunpack.c.l.b16 %v1093
    %v1130 = vunpack.c.l.b16 %v1094
    %v1131 = vunpack.c.l.b16 %v1095
    %v1132 = vunpack.c.l.b16 %v1096
    %v1133 = vunpack.c.l.b16 %v1097
    %v1134 = vunpack.c.l.b16 %v1098
    %v1135 = vunpack.c.l.b16 %v1099
    %v1136 = vunpack.c.l.b16 %v1100
    %v1137 = vunpack.c.l.b16 %v1101
    %v1138 = vunpack.c.l.b16 %v1102
    %v1139 = vunpack.c.l.b16 %v1103
    %v1140 = vpack.c.b16 %v1125, %v1124
    %v1141 = vpack.c.b16 %v1127, %v1126
    %v1142 = vpack.c.b16 %v1129, %v1128
    %v1143 = vpack.c.b16 %v1131, %v1130
    %v1144 = vpack.c.b16 %v1133, %v1132
    %v1145 = vpack.c.b16 %v1135, %v1134
    %v1146 = vpack.c.b16 %v1137, %v1136
    %v1147 = vpack.c.b16 %v1139, %v1138
    %1156 = vmatpush.bf16.msra.mxu0 %v1147
    %1157 = vmatpush.bf16.msra.mxu0 %v1146
    %1158 = vmatpush.bf16.msra.mxu0 %v1145
    %1159 = vmatpush.bf16.msra.mxu0 %v1144
    %1160 = vmatpush.bf16.msra.mxu0 %v1143
    %1161 = vmatpush.bf16.msra.mxu0 %v1142
    %1162 = vmatpush.bf16.msra.mxu0 %v1141
    %1163 = vmatpush.bf16.msra.mxu0 %v1140
    %1164 = vmatmul.bf16.gmra.mxu0 %v1087
    %v1165 = vpop.f32.mrf.mxu0
    %v1166 = vadd.f32 %v1106, %v1165
    %v1167 = vpop.f32.mrf.mxu0
    %1168 = vdwg.mxu0
    %v1169 = vmax.f32 %v1166, 0.0
    %v1170 = vpack.c.bf16 %v1169, %v1169
    %v1171 = vld [vmem:[%s7] sm:$0xf]
    %v1172 = vld [vmem:[%s7 + $0x4] sm:$0xf]
    %v1173 = vld [vmem:[%s7 + $0x8] sm:$0xf]
    %v1174 = vld [vmem:[%s7 + $0xc] sm:$0xf]
    %v1175 = vld [vmem:[%s7 + $0x10] sm:$0xf]
    %v1176 = vld [vmem:[%s7 + $0x14] sm:$0xf]
    %v1177 = vld [vmem:[%s7 + $0x18] sm:$0xf]
    %v1178 = vld [vmem:[%s7 + $0x1c] sm:$0xf]
    %v1179 = vld [vmem:[#allocation11] sm:$0x1]
    %v1181 = vperm.slane %v1179, 0
    %v1191 = vunpack.c.l.b16 %v1171
    %v1192 = vunpack.c.l.b16 %v1172
    %v1193 = vunpack.c.l.b16 %v1173
    %v1194 = vunpack.c.l.b16 %v1174
    %v1195 = vunpack.c.l.b16 %v1175
    %v1196 = vunpack.c.l.b16 %v1176
    %v1197 = vunpack.c.l.b16 %v1177
    %v1198 = vunpack.c.l.b16 %v1178
    %v1199 = vpack.c.b16 %v1192, %v1191
    %v1200 = vpack.c.b16 %v1194, %v1193
    %v1201 = vpack.c.b16 %v1196, %v1195
    %v1202 = vpack.c.b16 %v1198, %v1197
    %vm1207 = vcmask 523264
    %v1209 = vsel %vm1207, %v1170, 0
    %1211 = vmatpush.bf16.msra.mxu0 0
    %1212 = vmatpush.bf16.msra.mxu0 0
    %1213 = vmatpush.bf16.msra.mxu0 0
    %1214 = vmatpush.bf16.msra.mxu0 0
    %1215 = vmatpush.bf16.msra.mxu0 %v1202
    %1216 = vmatpush.bf16.msra.mxu0 %v1201
    %1217 = vmatpush.bf16.msra.mxu0 %v1200
    %1218 = vmatpush.bf16.msra.mxu0 %v1199
    %1219 = vmatmul.bf16.gmra.mxu0 %v1209
    %v1220 = vpop.f32.mrf.mxu0
    %v1221 = vadd.f32 %v1181, %v1220
    %v1222 = vpop.f32.mrf.mxu0
    %1223 = vdwg.mxu0
    %v1224 = vmax.f32 %v1221, 0.0
    %v1225 = vpack.c.bf16 %v1224, %v1224
    %v1226 = vld [vmem:[%s9] sm:$0xf]
    %v1227 = vld [vmem:[%s9 + $0x4] sm:$0xf]
    %v1228 = vld [vmem:[%s9 + $0x8] sm:$0xf]
    %v1229 = vld [vmem:[%s9 + $0xc] sm:$0xf]
    %v1230 = vld [vmem:[%s10] sm:$0x1]
    %v1232 = vperm.slane %v1230, 0
    %v1238 = vunpack.c.l.b16 %v1226
    %v1239 = vunpack.c.l.b16 %v1227
    %v1240 = vunpack.c.l.b16 %v1228
    %v1241 = vunpack.c.l.b16 %v1229
    %v1242 = vpack.c.b16 %v1239, %v1238
    %v1243 = vpack.c.b16 %v1241, %v1240
    %vm1246 = vcmask 261120
    %v1248 = vsel %vm1246, %v1225, 0
    %1250 = vmatpush.bf16.msra.mxu0 0
    %1251 = vmatpush.bf16.msra.mxu0 0
    %1252 = vmatpush.bf16.msra.mxu0 0
    %1253 = vmatpush.bf16.msra.mxu0 0
    %1254 = vmatpush.bf16.msra.mxu0 0
    %1255 = vmatpush.bf16.msra.mxu0 0
    %1256 = vmatpush.bf16.msra.mxu0 %v1243
    %1257 = vmatpush.bf16.msra.mxu0 %v1242
    %1258 = vmatmul.bf16.gmra.mxu0 %v1248
    %v1259 = vpop.f32.mrf.mxu0
    %v1260 = vadd.f32 %v1232, %v1259
    %v1261 = vpop.f32.mrf.mxu0
    %1262 = vdwg.mxu0
    %v1263 = vmax.f32 %v1260, 0.0
    %v1264 = vpack.c.bf16 %v1263, %v1263
    %v1265 = vld [vmem:[%s11] sm:$0xf]
    %v1266 = vld [vmem:[%s11 + $0x4] sm:$0xf]
    %v1267 = vld [vmem:[%s12] sm:$0x1]
    %v1269 = vperm.slane %v1267, 0
    %v1273 = vunpack.c.l.b16 %v1265
    %v1274 = vunpack.c.l.b16 %v1266
    %v1275 = vpack.c.b16 %v1274, %v1273
    %v1278 = vsel %vm738, %v1264, 0
    %1280 = vmatpush.bf16.msra.mxu0 0
    %1281 = vmatpush.bf16.msra.mxu0 0
    %1282 = vmatpush.bf16.msra.mxu0 0
    %1283 = vmatpush.bf16.msra.mxu0 0
    %1284 = vmatpush.bf16.msra.mxu0 0
    %1285 = vmatpush.bf16.msra.mxu0 0
    %1286 = vmatpush.bf16.msra.mxu0 0
    %1287 = vmatpush.bf16.msra.mxu0 %v1275
    %1288 = vmatmul.bf16.gmra.mxu0 %v1278
    %v1289 = vpop.f32.mrf.mxu0
    %v1290 = vadd.f32 %v1269, %v1289
    %v1291 = vpop.f32.mrf.mxu0
    %1292 = vdwg.mxu0
    %1293 = vmax.xlane.f32.xlu0 %v1290
    %v1294 = vpop.xlane.xlu0 %1293
    %v1295 = vsub.f32 %v1290, %v1294
    %v1296 = vmul.f32 %v1295, 1.442695
    %v1297 = vpow.pop %v1296
    %1298 = vadd.xlane.f32.xlu0 %v1297
    %v1299 = vpop.xlane.xlu0 %1298
    %v1300 = vlog2.pop %v1299
    %v1301 = vmul.f32 %v1300, 0.6931472
    %v1302 = vsub.f32 %v1295, %v1301
    %v1303 = vpack.c.bf16 %v1302, %v1302
    %1304 = vst [vmem:[#allocation13] sm:$0xf] %v1303
    // Predicated region
    $region78: #{tpu_custom_call.1} parent=1 // pred_check
      _
    $region79: #{tpu_custom_call.1} parent=1 // pred_check_branch
      %1306 = sbr.rel (0) target = $region81
    $region80: #{tpu_custom_call.1} parent=1 // pred_region
      %1308 = vsyncadd [#allocation4], 0
      %s1310 = sshll.u32 [#allocation13], 4
      %s1311 = int_to_ptr.vmem [resolvable:$true] %s1310
      %s1312 = sshll.u32 %s13, 4
      %s1313 = int_to_ptr.hbm [resolvable:$true] %s1312
      %1315 = dma.vmem_to_hbm [thread:$0]  %s1311, 64, %s1313, [#allocation4]
    $region81: #{tpu_custom_call.1} parent=1 // pred_fallthru
      _
    // Predicated region
    $region82: #{tpu_custom_call.1} parent=1 // pred_check
      _
    $region83: #{tpu_custom_call.1} parent=1 // pred_check_branch
      %1317 = sbr.rel (0) target = $region85
    $region84: #{tpu_custom_call.1} parent=1 // pred_region
      %1319 = dma.done [#allocation4], 64
    $region85: #{tpu_custom_call.1} parent=1 // pred_fallthru
      _
    %1320 = vsyncpa [#allocation3], 1
    %1321 = vsyncpa [#allocation6], 1
    %1322 = vsyncpa [#allocation9], 1
    %1323 = vsyncpa [#allocation12], 1
    %1324 = vsyncpa [#allocation4], 1

</llo_original>
